<compile_context>
chip_gen: v6e
topology: v6e:2x2x1
jax: 0.10.0
libtpu: 0.0.40
codegen_flags: <defaults>
</compile_context>

<pallas_src>
import jax
import jax.numpy as jnp
from jax.experimental import pallas as pl
from jax.experimental.pallas import tpu as pltpu


def _round_up(x, m):
    return ((x + m - 1) // m) * m


def _mlp_kernel(x_ref, w1_ref, b1_ref, w2_ref, b2_ref, o_ref):
    # fc1: (TB, 784) bf16 @ (784, Hp) bf16 -> f32 accumulate on the MXU.
    h = jnp.dot(x_ref[...], w1_ref[...], preferred_element_type=jnp.float32)
    h = jnp.maximum(h + b1_ref[...], 0.0)                      # bias + ReLU in f32
    # fc2: cast activations back to bf16 to stay on the bf16 MXU path.
    out = jnp.dot(h.astype(w2_ref.dtype), w2_ref[...],
                  preferred_element_type=jnp.float32)
    o_ref[...] = (out + b2_ref[...]).astype(o_ref.dtype)       # lane-dense (TB, 128) store


def net_forward(x, w1, b1, w2, b2, *, block_b=1024):
    """Fused MLP forward: ReLU(x @ w1 + b1) @ w2 + b2.

    x:  (B, 784) float32
    w1: (784, H) float32   (fc1.weight transposed)
    b1: (1, H)   float32
    w2: (H, C)   float32   (fc2.weight transposed)
    b2: (1, C)   float32
    returns (B, C) float32
    """
    B, F_in = x.shape
    H = w1.shape[1]
    C = w2.shape[1]

    # Lane-dense padding for the hidden and class dims (zero columns/rows are
    # exact no-ops through matmul + ReLU).
    Hp = _round_up(H, 128)
    Cp = _round_up(C, 128)

    # Batch tile: multiple of 16 (bf16 sublane packing), capped so the
    # double-buffered x tile + output tile stay far inside v7x's 64 MiB VMEM.
    TB = min(block_b, _round_up(B, 16))
    Bp = _round_up(B, TB)
    n_b = Bp // TB

    # Cast matmul operands to bf16 and zero-pad; biases stay f32.
    xp = jnp.zeros((Bp, F_in), jnp.bfloat16).at[:B, :].set(x.astype(jnp.bfloat16))
    w1p = jnp.zeros((F_in, Hp), jnp.bfloat16).at[:, :H].set(w1.astype(jnp.bfloat16))
    b1p = jnp.zeros((1, Hp), jnp.float32).at[:, :H].set(b1.astype(jnp.float32))
    w2p = jnp.zeros((Hp, Cp), jnp.bfloat16).at[:H, :C].set(w2.astype(jnp.bfloat16))
    b2p = jnp.zeros((1, Cp), jnp.float32).at[:, :C].set(b2.astype(jnp.float32))

    flops = 2 * Bp * F_in * Hp + 2 * Bp * Hp * Cp
    bytes_accessed = (xp.size * 2 + w1p.size * 2 + w2p.size * 2
                      + b1p.size * 4 + b2p.size * 4 + Bp * Cp * 4)

    out_padded = pl.pallas_call(
        _mlp_kernel,
        out_shape=jax.ShapeDtypeStruct((Bp, Cp), jnp.float32),
        grid_spec=pltpu.PrefetchScalarGridSpec(
            num_scalar_prefetch=0,
            grid=(n_b,),
            in_specs=[
                # x: streamed over the batch grid (double-buffered).
                pl.BlockSpec((TB, F_in), lambda i: (i, 0)),
                # weights / biases: constant block index -> fetched once, resident.
                pl.BlockSpec((F_in, Hp), lambda i: (0, 0)),
                pl.BlockSpec((1, Hp), lambda i: (0, 0)),
                pl.BlockSpec((Hp, Cp), lambda i: (0, 0)),
                pl.BlockSpec((1, Cp), lambda i: (0, 0)),
            ],
            out_specs=pl.BlockSpec((TB, Cp), lambda i: (i, 0)),
        ),
        compiler_params=pltpu.CompilerParams(
            dimension_semantics=("parallel",),   # shard batch tiles across TCs (v7x)
        ),
        cost_estimate=pl.CostEstimate(
            flops=flops, transcendentals=0, bytes_accessed=bytes_accessed),
    )(xp, w1p, b1p, w2p, b2p)

    return out_padded[:B, :C]


def _torch_like_linear_init(key, fan_in, fan_out):
    """Deterministic init mimicking torch.nn.Linear defaults:
    U(-1/sqrt(fan_in), 1/sqrt(fan_in)) for both weight and bias."""
    kw, kb = jax.random.split(key)
    bound = 1.0 / jnp.sqrt(jnp.asarray(fan_in, jnp.float32))
    # Stored transposed: (in_features, out_features)
    w = jax.random.uniform(kw, (fan_in, fan_out), jnp.float32, -bound, bound)
    b = jax.random.uniform(kb, (1, fan_out), jnp.float32, -bound, bound)
    return w, b


if __name__ == "__main__":
    key = jax.random.PRNGKey(0)
    k_x, k_fc1, k_fc2 = jax.random.split(key, 3)

    batch = 8
    in_features = 784          # fixed by the module (28*28 MNIST images)
    hidden_size = 32           # args.hidden_size (small synthetic choice)
    num_classes = 10

    # Synthetic MNIST-like input: (N, 1, 28, 28) flattened to (N, 784).
    x_nchw = jax.random.uniform(k_x, (batch, 1, 28, 28), jnp.float32)
    x = x_nchw.reshape(batch, in_features)

    w1, b1 = _torch_like_linear_init(k_fc1, in_features, hidden_size)
    w2, b2 = _torch_like_linear_init(k_fc2, hidden_size, num_classes)

    out = net_forward(x, w1, b1, w2, b2)
    out = jax.block_until_ready(out)
    assert out.shape == (batch, num_classes)

    # Reference with the same bf16-operand / f32-accumulate semantics.
    ref_h = jnp.maximum(
        jnp.dot(x.astype(jnp.bfloat16), w1.astype(jnp.bfloat16),
                preferred_element_type=jnp.float32) + b1, 0.0)
    ref_bf16 = jnp.dot(ref_h.astype(jnp.bfloat16), w2.astype(jnp.bfloat16),
                       preferred_element_type=jnp.float32) + b2
    assert jnp.allclose(out, ref_bf16, atol=2e-3, rtol=2e-3), \
        "mismatch vs bf16 reference"

    # Loose sanity check against the full-f32 reference.
    ref_f32 = jnp.maximum(x @ w1 + b1, 0.0) @ w2 + b2
    assert jnp.allclose(out, ref_f32, atol=3e-2, rtol=3e-2), \
        "mismatch vs f32 reference"

    print("KERNEL_OK")
</pallas_src>

<mosaic_0001>
module attributes {stable_mosaic.version = 11 : i64} {
  func.func @_mlp_kernel(%arg0: i32, %arg1: memref<16x784xbf16, #tpu.memory_space<vmem>>, %arg2: memref<784x128xbf16, #tpu.memory_space<vmem>>, %arg3: memref<1x128xf32, #tpu.memory_space<vmem>>, %arg4: memref<128x128xbf16, #tpu.memory_space<vmem>>, %arg5: memref<1x128xf32, #tpu.memory_space<vmem>>, %arg6: memref<16x128xf32, #tpu.memory_space<vmem>>) attributes {dimension_semantics = [#tpu.dimension_semantics<parallel>], iteration_bounds = array<i64: 1>, scalar_prefetch = 0 : i64, scratch_operands = 0 : i64, tpu.core_type = #tpu.core_type<tc>, window_params = [{transform_indices = @transform_0, window_bounds = array<i64: 16, 784>}, {pipeline_mode = #tpu.pipeline_mode<synchronous>, transform_indices = @transform_1, window_bounds = array<i64: 784, 128>}, {pipeline_mode = #tpu.pipeline_mode<synchronous>, transform_indices = @transform_2, window_bounds = array<i64: 1, 128>}, {pipeline_mode = #tpu.pipeline_mode<synchronous>, transform_indices = @transform_3, window_bounds = array<i64: 128, 128>}, {pipeline_mode = #tpu.pipeline_mode<synchronous>, transform_indices = @transform_4, window_bounds = array<i64: 1, 128>}, {transform_indices = @transform_5, window_bounds = array<i64: 16, 128>}]} {
    %c0 = arith.constant 0 : index
    %c0_0 = arith.constant 0 : index
    %0 = vector.load %arg1[%c0, %c0_0] : memref<16x784xbf16, #tpu.memory_space<vmem>>, vector<16x784xbf16>
    %c0_1 = arith.constant 0 : index
    %c0_2 = arith.constant 0 : index
    %1 = vector.load %arg2[%c0_1, %c0_2] : memref<784x128xbf16, #tpu.memory_space<vmem>>, vector<784x128xbf16>
    %cst = arith.constant dense<0.000000e+00> : vector<16x128xf32>
    %2 = tpu.matmul %0, %1, %cst {dimension_numbers = #tpu.dot_dimension_numbers<[1], [0], [0], [1], [0, 0, 1, 1], [], []>} : vector<16x784xbf16>, vector<784x128xbf16>, vector<16x128xf32> -> vector<16x128xf32>
    %c0_3 = arith.constant 0 : index
    %c0_4 = arith.constant 0 : index
    %3 = vector.load %arg3[%c0_3, %c0_4] : memref<1x128xf32, #tpu.memory_space<vmem>>, vector<1x128xf32>
    %4 = vector.broadcast %3 : vector<1x128xf32> to vector<16x128xf32>
    %5 = arith.addf %2, %4 : vector<16x128xf32>
    %cst_5 = arith.constant 0.000000e+00 : f32
    %6 = vector.broadcast %cst_5 : f32 to vector<16x128xf32>
    %7 = arith.maximumf %5, %6 : vector<16x128xf32>
    %8 = arith.truncf %7 : vector<16x128xf32> to vector<16x128xbf16>
    %c0_6 = arith.constant 0 : index
    %c0_7 = arith.constant 0 : index
    %9 = vector.load %arg4[%c0_6, %c0_7] : memref<128x128xbf16, #tpu.memory_space<vmem>>, vector<128x128xbf16>
    %cst_8 = arith.constant dense<0.000000e+00> : vector<16x128xf32>
    %10 = tpu.matmul %8, %9, %cst_8 {dimension_numbers = #tpu.dot_dimension_numbers<[1], [0], [0], [1], [0, 0, 1, 1], [], []>} : vector<16x128xbf16>, vector<128x128xbf16>, vector<16x128xf32> -> vector<16x128xf32>
    %c0_9 = arith.constant 0 : index
    %c0_10 = arith.constant 0 : index
    %11 = vector.load %arg5[%c0_9, %c0_10] : memref<1x128xf32, #tpu.memory_space<vmem>>, vector<1x128xf32>
    %12 = vector.broadcast %11 : vector<1x128xf32> to vector<16x128xf32>
    %13 = arith.addf %10, %12 : vector<16x128xf32>
    %c0_11 = arith.constant 0 : index
    %c0_12 = arith.constant 0 : index
    %14 = vector.load %arg6[%c0_11, %c0_12] : memref<16x128xf32, #tpu.memory_space<vmem>>, vector<16x128xf32>
    tpu.vector_store %arg6[%c0_11, %c0_12], %13 {strides = array<i32>} : memref<16x128xf32, #tpu.memory_space<vmem>>, vector<16x128xf32>,
    return
  }
  func.func @transform_0(%arg0: i32) -> (i32, i32) {
    %c0_i32 = arith.constant 0 : i32
    %c0_i32_0 = arith.constant 0 : i32
    return %arg0, %c0_i32 : i32, i32
  }
  func.func @transform_1(%arg0: i32) -> (i32, i32) {
    %c0_i32 = arith.constant 0 : i32
    %c0_i32_0 = arith.constant 0 : i32
    %c0_i32_1 = arith.constant 0 : i32
    return %c0_i32, %c0_i32_0 : i32, i32
  }
  func.func @transform_2(%arg0: i32) -> (i32, i32) {
    %c0_i32 = arith.constant 0 : i32
    %c0_i32_0 = arith.constant 0 : i32
    %c0_i32_1 = arith.constant 0 : i32
    return %c0_i32, %c0_i32_0 : i32, i32
  }
  func.func @transform_3(%arg0: i32) -> (i32, i32) {
    %c0_i32 = arith.constant 0 : i32
    %c0_i32_0 = arith.constant 0 : i32
    %c0_i32_1 = arith.constant 0 : i32
    return %c0_i32, %c0_i32_0 : i32, i32
  }
  func.func @transform_4(%arg0: i32) -> (i32, i32) {
    %c0_i32 = arith.constant 0 : i32
    %c0_i32_0 = arith.constant 0 : i32
    %c0_i32_1 = arith.constant 0 : i32
    return %c0_i32, %c0_i32_0 : i32, i32
  }
  func.func @transform_5(%arg0: i32) -> (i32, i32) {
    %c0_i32 = arith.constant 0 : i32
    %c0_i32_0 = arith.constant 0 : i32
    return %arg0, %c0_i32 : i32, i32
  }
}

</mosaic_0001>

<llo_original>
// kernel: tpu_custom_call.1
$region0: #{tpu_custom_call.1}
  #allocation0 [shape = 'u32[]', space=smem, size = 0x4, offset = 0x4, fixed_abs, tag = 'smem constant byte address 0x4 - core index']
  #allocation1 [shape = 'u32[144,128]{1,0:T(1,128)}', space=vmem, size = 0x12000, scoped, tag = 'internal scratch']
  %s0 = inlined_call_operand.hbm [shape: bf16[16,784], index: 0, kind: input, shape index: {}]
  %s1 = inlined_call_operand.hbm [shape: bf16[784,128], index: 1, kind: input, shape index: {}]
  %s2 = inlined_call_operand.vmem [shape: f32[1,128], index: 2, kind: input, shape index: {}]
  %s3 = inlined_call_operand.hbm [shape: bf16[128,128], index: 3, kind: input, shape index: {}]
  %s4 = inlined_call_operand.vmem [shape: f32[1,128], index: 4, kind: input, shape index: {}]
  %s5 = inlined_call_operand.hbm [shape: f32[16,128], index: 5, kind: output, shape index: {}]
  %s6 = sld [smem:[#allocation0]]
  $region42: #{tpu_custom_call.1} parent=0
    _
  %s8 = ssub.s32 1, %s6
  %s9 = scalar_select 0, %s8, %s6
  $region1: #{tpu_custom_call.1} parent=0
    #allocation2 [shape = 'u8[28672]{0}', space=vmem, size = 0x7000, scoped, tag = 'input window, operand 0, single buffered']
    #allocation3 [shape = 's32[1]{0}', space=sflag, size = 0x4, scoped, tag = 'scoped memory for tpu_custom_call.1']
    #allocation4 [shape = 's32[1]{0}', space=sflag, size = 0x4, scoped, tag = 'scoped memory for tpu_custom_call.1']
    #allocation5 [shape = 'u8[200704]{0}', space=vmem, size = 0x31000, scoped, tag = 'input window, operand 1, single buffered']
    #allocation6 [shape = 's32[1]{0}', space=sflag, size = 0x4, scoped, tag = 'scoped memory for tpu_custom_call.1']
    #allocation7 [shape = 'u8[32768]{0}', space=vmem, size = 0x8000, scoped, tag = 'input window, operand 3, single buffered']
    #allocation8 [shape = 'u8[8192]{0}', space=vmem, size = 0x2000, scoped, tag = 'output window, operand 0, single buffered']
    %10 = vsyncpa [#allocation3], 0
    %11 = vsyncpa [#allocation6], 0
    %12 = vsyncpa [#allocation4], 0
    // Predicated region
    $region2: #{tpu_custom_call.1} parent=1 // pred_check
      _
    $region3: #{tpu_custom_call.1} parent=1 // pred_check_branch
      %14 = sbr.rel (0) target = $region5
    $region4: #{tpu_custom_call.1} parent=1 // pred_region
      %s16 = ssub.s32 896, 896
      %17 = vsyncadd [#allocation3], %s16
      %s18 = sshll.u32 [#allocation2], 4
      %s19 = int_to_ptr.vmem [resolvable:$true] %s18
      %24 = dma.hbm_to_vmem [thread:$0]  %s0, 896, %s19, [#allocation3], 448, 448, 28
    $region5: #{tpu_custom_call.1} parent=1 // pred_fallthru
      _
    // Predicated region
    $region6: #{tpu_custom_call.1} parent=1 // pred_check
      _
    $region7: #{tpu_custom_call.1} parent=1 // pred_check_branch
      %26 = sbr.rel (0) target = $region9
    $region8: #{tpu_custom_call.1} parent=1 // pred_region
      %s28 = ssub.s32 6272, 6272
      %29 = vsyncadd [#allocation6], %s28
      %s30 = sshll.u32 [#allocation5], 4
      %s31 = int_to_ptr.vmem [resolvable:$true] %s30
      %36 = dma.hbm_to_vmem [thread:$0]  %s1, 6272, %s31, [#allocation6], 64, 64, 4
    $region9: #{tpu_custom_call.1} parent=1 // pred_fallthru
      _
    // Predicated region
    $region10: #{tpu_custom_call.1} parent=1 // pred_check
      _
    $region11: #{tpu_custom_call.1} parent=1 // pred_check_branch
      %38 = sbr.rel (0) target = $region13
    $region12: #{tpu_custom_call.1} parent=1 // pred_region
      _
    $region13: #{tpu_custom_call.1} parent=1 // pred_fallthru
      _
    // Predicated region
    $region14: #{tpu_custom_call.1} parent=1 // pred_check
      _
    $region15: #{tpu_custom_call.1} parent=1 // pred_check_branch
      %40 = sbr.rel (0) target = $region17
    $region16: #{tpu_custom_call.1} parent=1 // pred_region
      %s42 = ssub.s32 1024, 1024
      %43 = vsyncadd [#allocation6], %s42
      %s44 = sshll.u32 [#allocation7], 4
      %s45 = int_to_ptr.vmem [resolvable:$true] %s44
      %50 = dma.hbm_to_vmem [thread:$0]  %s3, 1024, %s45, [#allocation6], 64, 64, 4
    $region17: #{tpu_custom_call.1} parent=1 // pred_fallthru
      _
    // Predicated region
    $region18: #{tpu_custom_call.1} parent=1 // pred_check
      _
    $region19: #{tpu_custom_call.1} parent=1 // pred_check_branch
      %52 = sbr.rel (0) target = $region21
    $region20: #{tpu_custom_call.1} parent=1 // pred_region
      _
    $region21: #{tpu_custom_call.1} parent=1 // pred_fallthru
      _
    // Predicated region
    $region22: #{tpu_custom_call.1} parent=1 // pred_check
      _
    $region23: #{tpu_custom_call.1} parent=1 // pred_check_branch
      %54 = sbr.rel (0) target = $region25
    $region24: #{tpu_custom_call.1} parent=1 // pred_region
      %55 = dma.done [#allocation3], 896
    $region25: #{tpu_custom_call.1} parent=1 // pred_fallthru
      _
    // Predicated region
    $region26: #{tpu_custom_call.1} parent=1 // pred_check
      _
    $region27: #{tpu_custom_call.1} parent=1 // pred_check_branch
      %57 = sbr.rel (0) target = $region29
    $region28: #{tpu_custom_call.1} parent=1 // pred_region
      %58 = dma.done [#allocation6], 6272
    $region29: #{tpu_custom_call.1} parent=1 // pred_fallthru
      _
    // Predicated region
    $region30: #{tpu_custom_call.1} parent=1 // pred_check
      _
    $region31: #{tpu_custom_call.1} parent=1 // pred_check_branch
      %60 = sbr.rel (0) target = $region33
    $region32: #{tpu_custom_call.1} parent=1 // pred_region
      %61 = dma.done [#allocation6], 1024
    $region33: #{tpu_custom_call.1} parent=1 // pred_fallthru
      _
    %v63 = vld [vmem:[#allocation2] sm:$0xff]
    %v64 = vld [vmem:[#allocation2 + $0x8] sm:$0xff]
    %v65 = vld [vmem:[#allocation2 + $0x10] sm:$0xff]
    %v66 = vld [vmem:[#allocation2 + $0x18] sm:$0xf]
    %v67 = vld [vmem:[#allocation2 + $0x1c] sm:$0xff]
    %v68 = vld [vmem:[#allocation2 + $0x24] sm:$0xff]
    %v69 = vld [vmem:[#allocation2 + $0x2c] sm:$0xff]
    %v70 = vld [vmem:[#allocation2 + $0x34] sm:$0xf]
    %v71 = vld [vmem:[#allocation5] sm:$0xf]
    %v72 = vld [vmem:[#allocation5 + $0x4] sm:$0xf]
    %v73 = vld [vmem:[#allocation5 + $0x8] sm:$0xf]
    %v74 = vld [vmem:[#allocation5 + $0xc] sm:$0xf]
    %v75 = vld [vmem:[#allocation5 + $0x10] sm:$0xf]
    %v76 = vld [vmem:[#allocation5 + $0x14] sm:$0xf]
    %v77 = vld [vmem:[#allocation5 + $0x18] sm:$0xf]
    %v78 = vld [vmem:[#allocation5 + $0x1c] sm:$0xf]
    %v79 = vld [vmem:[#allocation5 + $0x20] sm:$0xf]
    %v80 = vld [vmem:[#allocation5 + $0x24] sm:$0xf]
    %v81 = vld [vmem:[#allocation5 + $0x28] sm:$0xf]
    %v82 = vld [vmem:[#allocation5 + $0x2c] sm:$0xf]
    %v83 = vld [vmem:[#allocation5 + $0x30] sm:$0xf]
    %v84 = vld [vmem:[#allocation5 + $0x34] sm:$0xf]
    %v85 = vld [vmem:[#allocation5 + $0x38] sm:$0xf]
    %v86 = vld [vmem:[#allocation5 + $0x3c] sm:$0xf]
    %v87 = vld [vmem:[#allocation5 + $0x40] sm:$0xf]
    %v88 = vld [vmem:[#allocation5 + $0x44] sm:$0xf]
    %v89 = vld [vmem:[#allocation5 + $0x48] sm:$0xf]
    %v90 = vld [vmem:[#allocation5 + $0x4c] sm:$0xf]
    %v91 = vld [vmem:[#allocation5 + $0x50] sm:$0xf]
    %v92 = vld [vmem:[#allocation5 + $0x54] sm:$0xf]
    %v93 = vld [vmem:[#allocation5 + $0x58] sm:$0xf]
    %v94 = vld [vmem:[#allocation5 + $0x5c] sm:$0xf]
    %v95 = vld [vmem:[#allocation5 + $0x60] sm:$0xf]
    %v96 = vld [vmem:[#allocation5 + $0x64] sm:$0xf]
    %v97 = vld [vmem:[#allocation5 + $0x68] sm:$0xf]
    %v98 = vld [vmem:[#allocation5 + $0x6c] sm:$0xf]
    %v99 = vld [vmem:[#allocation5 + $0x70] sm:$0xf]
    %v100 = vld [vmem:[#allocation5 + $0x74] sm:$0xf]
    %v101 = vld [vmem:[#allocation5 + $0x78] sm:$0xf]
    %v102 = vld [vmem:[#allocation5 + $0x7c] sm:$0xf]
    %v103 = vld [vmem:[#allocation5 + $0x80] sm:$0xf]
    %v104 = vld [vmem:[#allocation5 + $0x84] sm:$0xf]
    %v105 = vld [vmem:[#allocation5 + $0x88] sm:$0xf]
    %v106 = vld [vmem:[#allocation5 + $0x8c] sm:$0xf]
    %v107 = vld [vmem:[#allocation5 + $0x90] sm:$0xf]
    %v108 = vld [vmem:[#allocation5 + $0x94] sm:$0xf]
    %v109 = vld [vmem:[#allocation5 + $0x98] sm:$0xf]
    %v110 = vld [vmem:[#allocation5 + $0x9c] sm:$0xf]
    %v111 = vld [vmem:[#allocation5 + $0xa0] sm:$0xf]
    %v112 = vld [vmem:[#allocation5 + $0xa4] sm:$0xf]
    %v113 = vld [vmem:[#allocation5 + $0xa8] sm:$0xf]
    %v114 = vld [vmem:[#allocation5 + $0xac] sm:$0xf]
    %v115 = vld [vmem:[#allocation5 + $0xb0] sm:$0xf]
    %v116 = vld [vmem:[#allocation5 + $0xb4] sm:$0xf]
    %v117 = vld [vmem:[#allocation5 + $0xb8] sm:$0xf]
    %v118 = vld [vmem:[#allocation5 + $0xbc] sm:$0xf]
    %v119 = vld [vmem:[#allocation5 + $0xc0] sm:$0xf]
    %v120 = vld [vmem:[#allocation5 + $0xc4] sm:$0xf]
    %v121 = vld [vmem:[#allocation5 + $0xc8] sm:$0xf]
    %v122 = vld [vmem:[#allocation5 + $0xcc] sm:$0xf]
    %v123 = vld [vmem:[#allocation5 + $0xd0] sm:$0xf]
    %v124 = vld [vmem:[#allocation5 + $0xd4] sm:$0xf]
    %v125 = vld [vmem:[#allocation5 + $0xd8] sm:$0xf]
    %v126 = vld [vmem:[#allocation5 + $0xdc] sm:$0xf]
    %v127 = vld [vmem:[#allocation5 + $0xe0] sm:$0xf]
    %v128 = vld [vmem:[#allocation5 + $0xe4] sm:$0xf]
    %v129 = vld [vmem:[#allocation5 + $0xe8] sm:$0xf]
    %v130 = vld [vmem:[#allocation5 + $0xec] sm:$0xf]
    %v131 = vld [vmem:[#allocation5 + $0xf0] sm:$0xf]
    %v132 = vld [vmem:[#allocation5 + $0xf4] sm:$0xf]
    %v133 = vld [vmem:[#allocation5 + $0xf8] sm:$0xf]
    %v134 = vld [vmem:[#allocation5 + $0xfc] sm:$0xf]
    %v135 = vld [vmem:[#allocation5 + $0x100] sm:$0xf]
    %v136 = vld [vmem:[#allocation5 + $0x104] sm:$0xf]
    %v137 = vld [vmem:[#allocation5 + $0x108] sm:$0xf]
    %v138 = vld [vmem:[#allocation5 + $0x10c] sm:$0xf]
    %v139 = vld [vmem:[#allocation5 + $0x110] sm:$0xf]
    %v140 = vld [vmem:[#allocation5 + $0x114] sm:$0xf]
    %v141 = vld [vmem:[#allocation5 + $0x118] sm:$0xf]
    %v142 = vld [vmem:[#allocation5 + $0x11c] sm:$0xf]
    %v143 = vld [vmem:[#allocation5 + $0x120] sm:$0xf]
    %v144 = vld [vmem:[#allocation5 + $0x124] sm:$0xf]
    %v145 = vld [vmem:[#allocation5 + $0x128] sm:$0xf]
    %v146 = vld [vmem:[#allocation5 + $0x12c] sm:$0xf]
    %v147 = vld [vmem:[#allocation5 + $0x130] sm:$0xf]
    %v148 = vld [vmem:[#allocation5 + $0x134] sm:$0xf]
    %v149 = vld [vmem:[#allocation5 + $0x138] sm:$0xf]
    %v150 = vld [vmem:[#allocation5 + $0x13c] sm:$0xf]
    %v151 = vld [vmem:[#allocation5 + $0x140] sm:$0xf]
    %v152 = vld [vmem:[#allocation5 + $0x144] sm:$0xf]
    %v153 = vld [vmem:[#allocation5 + $0x148] sm:$0xf]
    %v154 = vld [vmem:[#allocation5 + $0x14c] sm:$0xf]
    %v155 = vld [vmem:[#allocation5 + $0x150] sm:$0xf]
    %v156 = vld [vmem:[#allocation5 + $0x154] sm:$0xf]
    %v157 = vld [vmem:[#allocation5 + $0x158] sm:$0xf]
    %v158 = vld [vmem:[#allocation5 + $0x15c] sm:$0xf]
    %v159 = vld [vmem:[#allocation5 + $0x160] sm:$0xf]
    %v160 = vld [vmem:[#allocation5 + $0x164] sm:$0xf]
    %v161 = vld [vmem:[#allocation5 + $0x168] sm:$0xf]
    %v162 = vld [vmem:[#allocation5 + $0x16c] sm:$0xf]
    %v163 = vld [vmem:[#allocation5 + $0x170] sm:$0xf]
    %v164 = vld [vmem:[#allocation5 + $0x174] sm:$0xf]
    %v165 = vld [vmem:[#allocation5 + $0x178] sm:$0xf]
    %v166 = vld [vmem:[#allocation5 + $0x17c] sm:$0xf]
    %v167 = vld [vmem:[#allocation5 + $0x180] sm:$0xf]
    %v168 = vld [vmem:[#allocation5 + $0x184] sm:$0xf]
    %v169 = vld [vmem:[%s2] sm:$0x1]
    %v171 = vlaneseq
    %v172 = vshrl.u32 %v171, 7
    %v173 = vsub.s32 0, %v172
    %v174 = vrot.slane %v169, %v173
    %v184 = vunpack.c.l.b16 %v63
    %v185 = vunpack.c.h.b16 %v63
    %v186 = vunpack.c.l.b16 %v64
    %v187 = vunpack.c.h.b16 %v64
    %v188 = vunpack.c.l.b16 %v65
    %v189 = vunpack.c.h.b16 %v65
    %v190 = vunpack.c.l.b16 %v66
    %v191 = vunpack.c.l.b16 %v67
    %v192 = vunpack.c.h.b16 %v67
    %v193 = vunpack.c.l.b16 %v68
    %v194 = vunpack.c.h.b16 %v68
    %v195 = vunpack.c.l.b16 %v69
    %v196 = vunpack.c.h.b16 %v69
    %v197 = vunpack.c.l.b16 %v70
    %v198 = vpack.c.b16 %v191, %v184
    %v199 = vpack.c.b16 %v192, %v185
    %v200 = vpack.c.b16 %v193, %v186
    %v201 = vpack.c.b16 %v194, %v187
    %v202 = vpack.c.b16 %v195, %v188
    %v203 = vpack.c.b16 %v196, %v189
    %v204 = vpack.c.b16 %v197, %v190
    %v309 = vunpack.c.l.b16 %v71
    %v310 = vunpack.c.l.b16 %v72
    %v311 = vunpack.c.l.b16 %v73
    %v312 = vunpack.c.l.b16 %v74
    %v313 = vunpack.c.l.b16 %v75
    %v314 = vunpack.c.l.b16 %v76
    %v315 = vunpack.c.l.b16 %v77
    %v316 = vunpack.c.l.b16 %v78
    %v317 = vunpack.c.l.b16 %v79
    %v318 = vunpack.c.l.b16 %v80
    %v319 = vunpack.c.l.b16 %v81
    %v320 = vunpack.c.l.b16 %v82
    %v321 = vunpack.c.l.b16 %v83
    %v322 = vunpack.c.l.b16 %v84
    %v323 = vunpack.c.l.b16 %v85
    %v324 = vunpack.c.l.b16 %v86
    %v325 = vunpack.c.l.b16 %v87
    %v326 = vunpack.c.l.b16 %v88
    %v327 = vunpack.c.l.b16 %v89
    %v328 = vunpack.c.l.b16 %v90
    %v329 = vunpack.c.l.b16 %v91
    %v330 = vunpack.c.l.b16 %v92
    %v331 = vunpack.c.l.b16 %v93
    %v332 = vunpack.c.l.b16 %v94
    %v333 = vunpack.c.l.b16 %v95
    %v334 = vunpack.c.l.b16 %v96
    %v335 = vunpack.c.l.b16 %v97
    %v336 = vunpack.c.l.b16 %v98
    %v337 = vunpack.c.l.b16 %v99
    %v338 = vunpack.c.l.b16 %v100
    %v339 = vunpack.c.l.b16 %v101
    %v340 = vunpack.c.l.b16 %v102
    %v341 = vunpack.c.l.b16 %v103
    %v342 = vunpack.c.l.b16 %v104
    %v343 = vunpack.c.l.b16 %v105
    %v344 = vunpack.c.l.b16 %v106
    %v345 = vunpack.c.l.b16 %v107
    %v346 = vunpack.c.l.b16 %v108
    %v347 = vunpack.c.l.b16 %v109
    %v348 = vunpack.c.l.b16 %v110
    %v349 = vunpack.c.l.b16 %v111
    %v350 = vunpack.c.l.b16 %v112
    %v351 = vunpack.c.l.b16 %v113
    %v352 = vunpack.c.l.b16 %v114
    %v353 = vunpack.c.l.b16 %v115
    %v354 = vunpack.c.l.b16 %v116
    %v355 = vunpack.c.l.b16 %v117
    %v356 = vunpack.c.l.b16 %v118
    %v357 = vunpack.c.l.b16 %v119
    %v358 = vunpack.c.l.b16 %v120
    %v359 = vunpack.c.l.b16 %v121
    %v360 = vunpack.c.l.b16 %v122
    %v361 = vunpack.c.l.b16 %v123
    %v362 = vunpack.c.l.b16 %v124
    %v363 = vunpack.c.l.b16 %v125
    %v364 = vunpack.c.l.b16 %v126
    %v365 = vunpack.c.l.b16 %v127
    %v366 = vunpack.c.l.b16 %v128
    %v367 = vunpack.c.l.b16 %v129
    %v368 = vunpack.c.l.b16 %v130
    %v369 = vunpack.c.l.b16 %v131
    %v370 = vunpack.c.l.b16 %v132
    %v371 = vunpack.c.l.b16 %v133
    %v372 = vunpack.c.l.b16 %v134
    %v373 = vunpack.c.l.b16 %v135
    %v374 = vunpack.c.l.b16 %v136
    %v375 = vunpack.c.l.b16 %v137
    %v376 = vunpack.c.l.b16 %v138
    %v377 = vunpack.c.l.b16 %v139
    %v378 = vunpack.c.l.b16 %v140
    %v379 = vunpack.c.l.b16 %v141
    %v380 = vunpack.c.l.b16 %v142
    %v381 = vunpack.c.l.b16 %v143
    %v382 = vunpack.c.l.b16 %v144
    %v383 = vunpack.c.l.b16 %v145
    %v384 = vunpack.c.l.b16 %v146
    %v385 = vunpack.c.l.b16 %v147
    %v386 = vunpack.c.l.b16 %v148
    %v387 = vunpack.c.l.b16 %v149
    %v388 = vunpack.c.l.b16 %v150
    %v389 = vunpack.c.l.b16 %v151
    %v390 = vunpack.c.l.b16 %v152
    %v391 = vunpack.c.l.b16 %v153
    %v392 = vunpack.c.l.b16 %v154
    %v393 = vunpack.c.l.b16 %v155
    %v394 = vunpack.c.l.b16 %v156
    %v395 = vunpack.c.l.b16 %v157
    %v396 = vunpack.c.l.b16 %v158
    %v397 = vunpack.c.l.b16 %v159
    %v398 = vunpack.c.l.b16 %v160
    %v399 = vunpack.c.l.b16 %v161
    %v400 = vunpack.c.l.b16 %v162
    %v401 = vunpack.c.l.b16 %v163
    %v402 = vunpack.c.l.b16 %v164
    %v403 = vunpack.c.l.b16 %v165
    %v404 = vunpack.c.l.b16 %v166
    %v405 = vunpack.c.l.b16 %v167
    %v406 = vunpack.c.l.b16 %v168
    %v407 = vpack.c.b16 %v310, %v309
    %v408 = vpack.c.b16 %v312, %v311
    %v409 = vpack.c.b16 %v314, %v313
    %v410 = vpack.c.b16 %v316, %v315
    %v411 = vpack.c.b16 %v318, %v317
    %v412 = vpack.c.b16 %v320, %v319
    %v413 = vpack.c.b16 %v322, %v321
    %v414 = vpack.c.b16 %v324, %v323
    %v415 = vpack.c.b16 %v326, %v325
    %v416 = vpack.c.b16 %v328, %v327
    %v417 = vpack.c.b16 %v330, %v329
    %v418 = vpack.c.b16 %v332, %v331
    %v419 = vpack.c.b16 %v334, %v333
    %v420 = vpack.c.b16 %v336, %v335
    %v421 = vpack.c.b16 %v338, %v337
    %v422 = vpack.c.b16 %v340, %v339
    %v423 = vpack.c.b16 %v342, %v341
    %v424 = vpack.c.b16 %v344, %v343
    %v425 = vpack.c.b16 %v346, %v345
    %v426 = vpack.c.b16 %v348, %v347
    %v427 = vpack.c.b16 %v350, %v349
    %v428 = vpack.c.b16 %v352, %v351
    %v429 = vpack.c.b16 %v354, %v353
    %v430 = vpack.c.b16 %v356, %v355
    %v431 = vpack.c.b16 %v358, %v357
    %v432 = vpack.c.b16 %v360, %v359
    %v433 = vpack.c.b16 %v362, %v361
    %v434 = vpack.c.b16 %v364, %v363
    %v435 = vpack.c.b16 %v366, %v365
    %v436 = vpack.c.b16 %v368, %v367
    %v437 = vpack.c.b16 %v370, %v369
    %v438 = vpack.c.b16 %v372, %v371
    %v439 = vpack.c.b16 %v374, %v373
    %v440 = vpack.c.b16 %v376, %v375
    %v441 = vpack.c.b16 %v378, %v377
    %v442 = vpack.c.b16 %v380, %v379
    %v443 = vpack.c.b16 %v382, %v381
    %v444 = vpack.c.b16 %v384, %v383
    %v445 = vpack.c.b16 %v386, %v385
    %v446 = vpack.c.b16 %v388, %v387
    %v447 = vpack.c.b16 %v390, %v389
    %v448 = vpack.c.b16 %v392, %v391
    %v449 = vpack.c.b16 %v394, %v393
    %v450 = vpack.c.b16 %v396, %v395
    %v451 = vpack.c.b16 %v398, %v397
    %v452 = vpack.c.b16 %v400, %v399
    %v453 = vpack.c.b16 %v402, %v401
    %v454 = vpack.c.b16 %v404, %v403
    %v455 = vpack.c.b16 %v406, %v405
    %vm505 = vcmask 130048
    %v507 = vsel %vm505, %v204, 0
    %509 = vmatprep.subr.bf16.mxu0 0
    %510 = vmatpush1.bf16.msra.mxu0 %v414
    %511 = vmatprep.subr.bf16.mxu0 0
    %512 = vmatpush1.bf16.msra.mxu0 %v413
    %513 = vmatprep.subr.bf16.mxu0 0
    %514 = vmatpush1.bf16.msra.mxu0 %v412
    %515 = vmatprep.subr.bf16.mxu0 0
    %516 = vmatpush1.bf16.msra.mxu0 %v411
    %517 = vmatprep.subr.bf16.mxu0 0
    %518 = vmatpush1.bf16.msra.mxu0 %v410
    %519 = vmatprep.subr.bf16.mxu0 0
    %520 = vmatpush1.bf16.msra.mxu0 %v409
    %521 = vmatprep.subr.bf16.mxu0 0
    %522 = vmatpush1.bf16.msra.mxu0 %v408
    %523 = vmatprep.subr.bf16.mxu0 0
    %524 = vmatpush1.bf16.msra.mxu0 %v407
    %525 = vmatprep.subr.bf16.mxu0 0
    %526 = vmatpush2.bf16.msra.mxu0 %v422
    %527 = vmatprep.subr.bf16.mxu0 0
    %528 = vmatpush2.bf16.msra.mxu0 %v421
    %529 = vmatprep.subr.bf16.mxu0 0
    %530 = vmatpush2.bf16.msra.mxu0 %v420
    %531 = vmatprep.subr.bf16.mxu0 0
    %532 = vmatpush2.bf16.msra.mxu0 %v419
    %533 = vmatprep.subr.bf16.mxu0 0
    %534 = vmatpush2.bf16.msra.mxu0 %v418
    %535 = vmatprep.subr.bf16.mxu0 0
    %536 = vmatpush2.bf16.msra.mxu0 %v417
    %537 = vmatprep.subr.bf16.mxu0 0
    %538 = vmatpush2.bf16.msra.mxu0 %v416
    %539 = vmatprep.subr.bf16.mxu0 0
    %540 = vmatpush2.bf16.msra.mxu0 %v415
    %541 = vmatprep.mubr.bf16.mxu0 %v199
    %542 = vmatmul.mubr.bf16.gmra.mxu0 %v198
    %v543 = vpop.f32.mrf.mxu0
    %v544 = vadd.f32 %v174, %v543
    %v545 = vpop.f32.mrf.mxu0
    %v546 = vpop.f32.mrf.mxu0
    %v547 = vadd.f32 %v174, %v546
    %v548 = vpop.f32.mrf.mxu0
    %549 = vdwg.mxu0
    %550 = vmatprep.subr.bf16.mxu0 0
    %551 = vmatpush1.bf16.msra.mxu0 %v430
    %552 = vmatprep.subr.bf16.mxu0 0
    %553 = vmatpush1.bf16.msra.mxu0 %v429
    %554 = vmatprep.subr.bf16.mxu0 0
    %555 = vmatpush1.bf16.msra.mxu0 %v428
    %556 = vmatprep.subr.bf16.mxu0 0
    %557 = vmatpush1.bf16.msra.mxu0 %v427
    %558 = vmatprep.subr.bf16.mxu0 0
    %559 = vmatpush1.bf16.msra.mxu0 %v426
    %560 = vmatprep.subr.bf16.mxu0 0
    %561 = vmatpush1.bf16.msra.mxu0 %v425
    %562 = vmatprep.subr.bf16.mxu0 0
    %563 = vmatpush1.bf16.msra.mxu0 %v424
    %564 = vmatprep.subr.bf16.mxu0 0
    %565 = vmatpush1.bf16.msra.mxu0 %v423
    %566 = vmatprep.subr.bf16.mxu0 0
    %567 = vmatpush2.bf16.msra.mxu0 %v438
    %568 = vmatprep.subr.bf16.mxu0 0
    %569 = vmatpush2.bf16.msra.mxu0 %v437
    %570 = vmatprep.subr.bf16.mxu0 0
    %571 = vmatpush2.bf16.msra.mxu0 %v436
    %572 = vmatprep.subr.bf16.mxu0 0
    %573 = vmatpush2.bf16.msra.mxu0 %v435
    %574 = vmatprep.subr.bf16.mxu0 0
    %575 = vmatpush2.bf16.msra.mxu0 %v434
    %576 = vmatprep.subr.bf16.mxu0 0
    %577 = vmatpush2.bf16.msra.mxu0 %v433
    %578 = vmatprep.subr.bf16.mxu0 0
    %579 = vmatpush2.bf16.msra.mxu0 %v432
    %580 = vmatprep.subr.bf16.mxu0 0
    %581 = vmatpush2.bf16.msra.mxu0 %v431
    %582 = vmatprep.mubr.bf16.mxu0 %v201
    %583 = vmatmul.mubr.bf16.gmra.mxu0 %v200
    %v584 = vpop.f32.mrf.mxu0
    %v585 = vadd.f32 %v544, %v584
    %v586 = vpop.f32.mrf.mxu0
    %v587 = vpop.f32.mrf.mxu0
    %v588 = vadd.f32 %v547, %v587
    %v589 = vpop.f32.mrf.mxu0
    %590 = vdwg.mxu0
    %591 = vmatprep.subr.bf16.mxu0 0
    %592 = vmatpush1.bf16.msra.mxu0 %v446
    %593 = vmatprep.subr.bf16.mxu0 0
    %594 = vmatpush1.bf16.msra.mxu0 %v445
    %595 = vmatprep.subr.bf16.mxu0 0
    %596 = vmatpush1.bf16.msra.mxu0 %v444
    %597 = vmatprep.subr.bf16.mxu0 0
    %598 = vmatpush1.bf16.msra.mxu0 %v443
    %599 = vmatprep.subr.bf16.mxu0 0
    %600 = vmatpush1.bf16.msra.mxu0 %v442
    %601 = vmatprep.subr.bf16.mxu0 0
    %602 = vmatpush1.bf16.msra.mxu0 %v441
    %603 = vmatprep.subr.bf16.mxu0 0
    %604 = vmatpush1.bf16.msra.mxu0 %v440
    %605 = vmatprep.subr.bf16.mxu0 0
    %606 = vmatpush1.bf16.msra.mxu0 %v439
    %607 = vmatprep.subr.bf16.mxu0 0
    %608 = vmatpush2.bf16.msra.mxu0 %v454
    %609 = vmatprep.subr.bf16.mxu0 0
    %610 = vmatpush2.bf16.msra.mxu0 %v453
    %611 = vmatprep.subr.bf16.mxu0 0
    %612 = vmatpush2.bf16.msra.mxu0 %v452
    %613 = vmatprep.subr.bf16.mxu0 0
    %614 = vmatpush2.bf16.msra.mxu0 %v451
    %615 = vmatprep.subr.bf16.mxu0 0
    %616 = vmatpush2.bf16.msra.mxu0 %v450
    %617 = vmatprep.subr.bf16.mxu0 0
    %618 = vmatpush2.bf16.msra.mxu0 %v449
    %619 = vmatprep.subr.bf16.mxu0 0
    %620 = vmatpush2.bf16.msra.mxu0 %v448
    %621 = vmatprep.subr.bf16.mxu0 0
    %622 = vmatpush2.bf16.msra.mxu0 %v447
    %623 = vmatprep.mubr.bf16.mxu0 %v203
    %624 = vmatmul.mubr.bf16.gmra.mxu0 %v202
    %v625 = vpop.f32.mrf.mxu0
    %v626 = vadd.f32 %v585, %v625
    %v627 = vpop.f32.mrf.mxu0
    %v628 = vpop.f32.mrf.mxu0
    %v629 = vadd.f32 %v588, %v628
    %v630 = vpop.f32.mrf.mxu0
    %631 = vdwg.mxu0
    %632 = vmatprep.subr.bf16.mxu0 0
    %633 = vmatpush1.bf16.msra.mxu0 0
    %634 = vmatprep.subr.bf16.mxu0 0
    %635 = vmatpush1.bf16.msra.mxu0 0
    %636 = vmatprep.subr.bf16.mxu0 0
    %637 = vmatpush1.bf16.msra.mxu0 0
    %638 = vmatprep.subr.bf16.mxu0 0
    %639 = vmatpush1.bf16.msra.mxu0 0
    %640 = vmatprep.subr.bf16.mxu0 0
    %641 = vmatpush1.bf16.msra.mxu0 0
    %642 = vmatprep.subr.bf16.mxu0 0
    %643 = vmatpush1.bf16.msra.mxu0 0
    %644 = vmatprep.subr.bf16.mxu0 0
    %645 = vmatpush1.bf16.msra.mxu0 0
    %646 = vmatprep.subr.bf16.mxu0 0
    %647 = vmatpush1.bf16.msra.mxu0 %v455
    %648 = vmatprep.subr.bf16.mxu0 0
    %649 = vmatpush2.bf16.msra.mxu0 0
    %650 = vmatprep.subr.bf16.mxu0 0
    %651 = vmatpush2.bf16.msra.mxu0 0
    %652 = vmatprep.subr.bf16.mxu0 0
    %653 = vmatpush2.bf16.msra.mxu0 0
    %654 = vmatprep.subr.bf16.mxu0 0
    %655 = vmatpush2.bf16.msra.mxu0 0
    %656 = vmatprep.subr.bf16.mxu0 0
    %657 = vmatpush2.bf16.msra.mxu0 0
    %658 = vmatprep.subr.bf16.mxu0 0
    %659 = vmatpush2.bf16.msra.mxu0 0
    %660 = vmatprep.subr.bf16.mxu0 0
    %661 = vmatpush2.bf16.msra.mxu0 0
    %662 = vmatprep.subr.bf16.mxu0 0
    %663 = vmatpush2.bf16.msra.mxu0 0
    %664 = vmatprep.mubr.bf16.mxu0 0
    %665 = vmatmul.mubr.bf16.gmra.mxu0 %v507
    %v666 = vpop.f32.mrf.mxu0
    %v667 = vadd.f32 %v626, %v666
    %v668 = vpop.f32.mrf.mxu0
    %v669 = vpop.f32.mrf.mxu0
    %v670 = vadd.f32 %v629, %v669
    %v671 = vpop.f32.mrf.mxu0
    %672 = vdwg.mxu0
    %v673 = vmax.f32 %v667, 0.0
    %v674 = vmax.f32 %v670, 0.0
    %v675 = vpack.c.bf16 %v674, %v673
    %v676 = vld [vmem:[#allocation7] sm:$0xf]
    %v677 = vld [vmem:[#allocation7 + $0x4] sm:$0xf]
    %v678 = vld [vmem:[#allocation7 + $0x8] sm:$0xf]
    %v679 = vld [vmem:[#allocation7 + $0xc] sm:$0xf]
    %v680 = vld [vmem:[#allocation7 + $0x10] sm:$0xf]
    %v681 = vld [vmem:[#allocation7 + $0x14] sm:$0xf]
    %v682 = vld [vmem:[#allocation7 + $0x18] sm:$0xf]
    %v683 = vld [vmem:[#allocation7 + $0x1c] sm:$0xf]
    %v684 = vld [vmem:[#allocation7 + $0x20] sm:$0xf]
    %v685 = vld [vmem:[#allocation7 + $0x24] sm:$0xf]
    %v686 = vld [vmem:[#allocation7 + $0x28] sm:$0xf]
    %v687 = vld [vmem:[#allocation7 + $0x2c] sm:$0xf]
    %v688 = vld [vmem:[#allocation7 + $0x30] sm:$0xf]
    %v689 = vld [vmem:[#allocation7 + $0x34] sm:$0xf]
    %v690 = vld [vmem:[#allocation7 + $0x38] sm:$0xf]
    %v691 = vld [vmem:[#allocation7 + $0x3c] sm:$0xf]
    %v692 = vld [vmem:[%s4] sm:$0x1]
    %v694 = vlaneseq
    %v695 = vshrl.u32 %v694, 7
    %v696 = vsub.s32 0, %v695
    %v697 = vrot.slane %v692, %v696
    %v715 = vunpack.c.l.b16 %v676
    %v716 = vunpack.c.l.b16 %v677
    %v717 = vunpack.c.l.b16 %v678
    %v718 = vunpack.c.l.b16 %v679
    %v719 = vunpack.c.l.b16 %v680
    %v720 = vunpack.c.l.b16 %v681
    %v721 = vunpack.c.l.b16 %v682
    %v722 = vunpack.c.l.b16 %v683
    %v723 = vunpack.c.l.b16 %v684
    %v724 = vunpack.c.l.b16 %v685
    %v725 = vunpack.c.l.b16 %v686
    %v726 = vunpack.c.l.b16 %v687
    %v727 = vunpack.c.l.b16 %v688
    %v728 = vunpack.c.l.b16 %v689
    %v729 = vunpack.c.l.b16 %v690
    %v730 = vunpack.c.l.b16 %v691
    %v731 = vpack.c.b16 %v716, %v715
    %v732 = vpack.c.b16 %v718, %v717
    %v733 = vpack.c.b16 %v720, %v719
    %v734 = vpack.c.b16 %v722, %v721
    %v735 = vpack.c.b16 %v724, %v723
    %v736 = vpack.c.b16 %v726, %v725
    %v737 = vpack.c.b16 %v728, %v727
    %v738 = vpack.c.b16 %v730, %v729
    %747 = vmatprep.subr.bf16.mxu0 0
    %748 = vmatpush1.bf16.msra.mxu0 %v738
    %749 = vmatprep.subr.bf16.mxu0 0
    %750 = vmatpush1.bf16.msra.mxu0 %v737
    %751 = vmatprep.subr.bf16.mxu0 0
    %752 = vmatpush1.bf16.msra.mxu0 %v736
    %753 = vmatprep.subr.bf16.mxu0 0
    %754 = vmatpush1.bf16.msra.mxu0 %v735
    %755 = vmatprep.subr.bf16.mxu0 0
    %756 = vmatpush1.bf16.msra.mxu0 %v734
    %757 = vmatprep.subr.bf16.mxu0 0
    %758 = vmatpush1.bf16.msra.mxu0 %v733
    %759 = vmatprep.subr.bf16.mxu0 0
    %760 = vmatpush1.bf16.msra.mxu0 %v732
    %761 = vmatprep.subr.bf16.mxu0 0
    %762 = vmatpush1.bf16.msra.mxu0 %v731
    %763 = vmatprep.subr.bf16.mxu0 0
    %764 = vmatpush2.bf16.msra.mxu0 0
    %765 = vmatprep.subr.bf16.mxu0 0
    %766 = vmatpush2.bf16.msra.mxu0 0
    %767 = vmatprep.subr.bf16.mxu0 0
    %768 = vmatpush2.bf16.msra.mxu0 0
    %769 = vmatprep.subr.bf16.mxu0 0
    %770 = vmatpush2.bf16.msra.mxu0 0
    %771 = vmatprep.subr.bf16.mxu0 0
    %772 = vmatpush2.bf16.msra.mxu0 0
    %773 = vmatprep.subr.bf16.mxu0 0
    %774 = vmatpush2.bf16.msra.mxu0 0
    %775 = vmatprep.subr.bf16.mxu0 0
    %776 = vmatpush2.bf16.msra.mxu0 0
    %777 = vmatprep.subr.bf16.mxu0 0
    %778 = vmatpush2.bf16.msra.mxu0 0
    %779 = vmatprep.mubr.bf16.mxu0 0
    %780 = vmatmul.mubr.bf16.gmra.mxu0 %v675
    %v781 = vpop.f32.mrf.mxu0
    %v782 = vadd.f32 %v697, %v781
    %v783 = vpop.f32.mrf.mxu0
    %v784 = vpop.f32.mrf.mxu0
    %v785 = vadd.f32 %v697, %v784
    %v786 = vpop.f32.mrf.mxu0
    %787 = vdwg.mxu0
    %788 = vst [vmem:[#allocation8] sm:$0xff] %v782
    %789 = vst [vmem:[#allocation8 + $0x8] sm:$0xff] %v785
    // Predicated region
    $region34: #{tpu_custom_call.1} parent=1 // pred_check
      _
    $region35: #{tpu_custom_call.1} parent=1 // pred_check_branch
      %791 = sbr.rel (0) target = $region37
    $region36: #{tpu_custom_call.1} parent=1 // pred_region
      %s793 = ssub.s32 256, 256
      %794 = vsyncadd [#allocation4], %s793
      %s795 = sshll.u32 [#allocation8], 4
      %s796 = int_to_ptr.vmem [resolvable:$true] %s795
      %801 = dma.vmem_to_hbm [thread:$0]  %s796, 256, %s5, [#allocation4], 128, 128, 8
    $region37: #{tpu_custom_call.1} parent=1 // pred_fallthru
      _
    // Predicated region
    $region38: #{tpu_custom_call.1} parent=1 // pred_check
      _
    $region39: #{tpu_custom_call.1} parent=1 // pred_check_branch
      %803 = sbr.rel (0) target = $region41
    $region40: #{tpu_custom_call.1} parent=1 // pred_region
      %804 = dma.done [#allocation4], 256
    $region41: #{tpu_custom_call.1} parent=1 // pred_fallthru
      _
    %805 = vsyncpa [#allocation3], 1
    %806 = vsyncpa [#allocation6], 1
    %807 = vsyncpa [#allocation4], 1

</llo_original>
